<compile_context>
chip_gen: v7x
topology: tpu7x:2x2x1
jax: 0.10.0
libtpu: 0.0.40
codegen_flags: <defaults>
</compile_context>

<pallas_src>
import jax
import jax.numpy as jnp
from jax.experimental import pallas as pl
from jax.experimental.pallas import tpu as pltpu


def _device_kind() -> str:
    try:
        return jax.devices()[0].device_kind.lower()
    except Exception:  # pragma: no cover - defensive
        return ""


def _is_v5e(kind: str) -> bool:
    return ("v5 lite" in kind) or ("v5e" in kind) or ("v5lite" in kind)


def _block_byte_budget(kind: str) -> int:
    # Per-input-block HBM bytes. Double-buffered in+out => 4x this in VMEM.
    if _is_v5e(kind):
        return 2 * 1024 * 1024   # v5e: ~0.82 TB/s HBM; 2 MiB already near roofline
    if "v7" in kind:
        return 8 * 1024 * 1024   # v7x: ~3.2 TB/s HBM; amortize per-step overhead harder
    return 4 * 1024 * 1024       # v6e / default


def _make_srelu_kernel(tr, tl, ar, compute_dtype):
    """Build an SReLU_limited kernel with params baked in as constants."""
    scale = ar / (tr - tl)  # compile-time constant; no in-kernel divide

    def kernel(x_ref, o_ref):
        x = x_ref[...].astype(compute_dtype)
        y = jnp.clip((x - tl) * scale, 0.0, ar)
        o_ref[...] = y.astype(o_ref.dtype)

    return kernel


def _srelu_pointwise(x, tr, tl, ar, compute_dtype):
    """Plain-JAX tail path with identical semantics/dtype handling."""
    scale = ar / (tr - tl)
    y = jnp.clip((x.astype(compute_dtype) - tl) * scale, 0.0, ar)
    return y.astype(x.dtype)


def srelu_limited(x, tr=2.0, tl=-2.0, ar=2.0):
    """SReLU_limited forward pass implemented with a Pallas TPU kernel."""
    tr, tl, ar = float(tr), float(tl), float(ar)
    if not tr > tl:
        raise ValueError(f"SReLU_limited requires tr > tl, got tr={tr}, tl={tl}")

    orig_shape = x.shape
    dtype = x.dtype
    itemsize = jnp.dtype(dtype).itemsize

    kind = _device_kind()
    # bf16 arithmetic is fine on v6e/v7x (bf16 VPU); keep f32 math on v5e.
    if dtype == jnp.bfloat16 and not _is_v5e(kind):
        compute_dtype = jnp.bfloat16
    else:
        compute_dtype = jnp.float32

    flat = x.reshape(-1)
    n = flat.shape[0]
    if n == 0:
        return x

    # Pick the widest lane-dense width that divides n exactly; otherwise run
    # the kernel on the divisible bulk and finish the tiny tail with jnp.clip
    # (no full-array pad + slice HBM passes).
    lane = None
    for w in (2048, 1024, 512, 256, 128):
        if n >= w and n % w == 0:
            lane = w
            n_bulk = n
            break
    if lane is None:
        lane = 512 if n >= 512 else 128
        n_bulk = (n // lane) * lane

    if n_bulk == 0:
        # Tiny input (< one lane row): not worth a pallas_call.
        out = _srelu_pointwise(flat, tr, tl, ar, compute_dtype)
        return out.reshape(orig_shape)

    bulk = flat[:n_bulk] if n_bulk != n else flat
    x2d = bulk.reshape(-1, lane)
    rows = x2d.shape[0]

    # Byte-based block sizing so bf16/int8 are not penalized with tiny blocks.
    sublane = max(8, 32 // itemsize)  # 8 f32 / 16 bf16 / 32 int8 sublane packing
    block_bytes = _block_byte_budget(kind)
    target_rows = max(sublane, block_bytes // (lane * itemsize))
    block_rows = min(rows, target_rows)

    # Guarantee >= 2 (>= 4 when large) grid steps on medium/large inputs so the
    # "parallel" axis can shard across both v7x TensorCores.
    total_bytes = rows * lane * itemsize
    if total_bytes > 2 * 1024 * 1024:
        min_steps = 4 if total_bytes >= 4 * block_bytes else 2
        block_rows = min(block_rows, pl.cdiv(rows, min_steps))

    if block_rows != rows:
        # (8,128) BlockSpec constraint + dtype sublane packing; partial last
        # block is masked by Pallas via the cdiv grid.
        block_rows = max(sublane, (block_rows // sublane) * sublane)
    grid = (pl.cdiv(rows, block_rows),)

    kernel = _make_srelu_kernel(tr, tl, ar, compute_dtype)

    out2d = pl.pallas_call(
        kernel,
        out_shape=jax.ShapeDtypeStruct(x2d.shape, dtype),
        grid=grid,
        in_specs=[pl.BlockSpec((block_rows, lane), lambda i: (i, 0))],
        out_specs=pl.BlockSpec((block_rows, lane), lambda i: (i, 0)),
        compiler_params=pltpu.CompilerParams(
            dimension_semantics=("parallel",),
            vmem_limit_bytes=48 * 1024 * 1024,  # headroom for 8 MiB blocks x 4 buffers
        ),
    )(x2d)

    out = out2d.reshape(-1)
    if n_bulk != n:
        tail = _srelu_pointwise(flat[n_bulk:], tr, tl, ar, compute_dtype)
        out = jnp.concatenate([out, tail])
    return out.reshape(orig_shape)


def _srelu_ref(x, tr=2.0, tl=-2.0, ar=2.0):
    """Pure-JAX reference that mirrors the PyTorch expression literally."""
    x = x.astype(jnp.float32)
    return (
        (x >= tr).astype(jnp.float32) * ar
        + (x < tr).astype(jnp.float32)
        * (x > tl).astype(jnp.float32)
        * ar
        * (x - tl)
        / (tr - tl)
        + (x <= tl).astype(jnp.float32) * 0.0
    )


if __name__ == "__main__":
    key = jax.random.PRNGKey(0)

    # Main case: small NCHW input, scaled so all three SReLU regimes are hit.
    x = 4.0 * jax.random.normal(key, (2, 4, 16, 16), dtype=jnp.float32)
    out = jax.block_until_ready(srelu_limited(x))
    ref = _srelu_ref(x)
    assert out.shape == x.shape and out.dtype == x.dtype
    assert jnp.allclose(out, ref, atol=1e-6, rtol=1e-6), "mismatch vs reference (main)"

    # Non-128-divisible size: exercises the bulk + tail split path.
    k2 = jax.random.PRNGKey(1)
    x2 = 4.0 * jax.random.normal(k2, (1, 1000), dtype=jnp.float32)
    out2 = jax.block_until_ready(srelu_limited(x2))
    assert jnp.allclose(out2, _srelu_ref(x2), atol=1e-6, rtol=1e-6), "mismatch (tail)"

    # Tiny input (< one lane row): pointwise-only path.
    k3 = jax.random.PRNGKey(2)
    x3 = 4.0 * jax.random.normal(k3, (3, 5, 7), dtype=jnp.float32)
    out3 = jax.block_until_ready(srelu_limited(x3))
    assert jnp.allclose(out3, _srelu_ref(x3), atol=1e-6, rtol=1e-6), "mismatch (tiny)"

    print("KERNEL_OK")
</pallas_src>

<mosaic_0001>
module attributes {stable_mosaic.version = 11 : i64} {
  func.func @kernel(%arg0: i32, %arg1: memref<1x2048xf32, #tpu.memory_space<vmem>>, %arg2: memref<1x2048xf32, #tpu.memory_space<vmem>>) attributes {dimension_semantics = [#tpu.dimension_semantics<parallel>], iteration_bounds = array<i64: 1>, scalar_prefetch = 0 : i64, scratch_operands = 0 : i64, tpu.core_type = #tpu.core_type<tc>, window_params = [{transform_indices = @transform_0, window_bounds = array<i64: 1, 2048>}, {transform_indices = @transform_1, window_bounds = array<i64: 1, 2048>}]} {
    %c0 = arith.constant 0 : index
    %c0_0 = arith.constant 0 : index
    %0 = vector.load %arg1[%c0, %c0_0] : memref<1x2048xf32, #tpu.memory_space<vmem>>, vector<1x2048xf32>
    %cst = arith.constant -2.000000e+00 : f32
    %1 = vector.broadcast %cst : f32 to vector<1x2048xf32>
    %2 = arith.subf %0, %1 : vector<1x2048xf32>
    %cst_1 = arith.constant 5.000000e-01 : f32
    %3 = vector.broadcast %cst_1 : f32 to vector<1x2048xf32>
    %4 = arith.mulf %2, %3 : vector<1x2048xf32>
    %cst_2 = arith.constant 0.000000e+00 : f32
    %cst_3 = arith.constant 2.000000e+00 : f32
    %5 = vector.broadcast %cst_2 : f32 to vector<1x2048xf32>
    %6 = arith.maximumf %5, %4 : vector<1x2048xf32>
    %7 = vector.broadcast %cst_3 : f32 to vector<1x2048xf32>
    %8 = arith.minimumf %7, %6 : vector<1x2048xf32>
    %c0_4 = arith.constant 0 : index
    %c0_5 = arith.constant 0 : index
    %9 = vector.load %arg2[%c0_4, %c0_5] : memref<1x2048xf32, #tpu.memory_space<vmem>>, vector<1x2048xf32>
    tpu.vector_store %arg2[%c0_4, %c0_5], %8 {strides = array<i32>} : memref<1x2048xf32, #tpu.memory_space<vmem>>, vector<1x2048xf32>,
    return
  }
  func.func @transform_0(%arg0: i32) -> (i32, i32) {
    %c0_i32 = arith.constant 0 : i32
    %c0_i32_0 = arith.constant 0 : i32
    return %arg0, %c0_i32 : i32, i32
  }
  func.func @transform_1(%arg0: i32) -> (i32, i32) {
    %c0_i32 = arith.constant 0 : i32
    %c0_i32_0 = arith.constant 0 : i32
    return %arg0, %c0_i32 : i32, i32
  }
}

</mosaic_0001>

<llo_original>
// kernel: tpu_custom_call.1
$region0: #{tpu_custom_call.1}
  #allocation0 [shape = 'u32[]', space=smem, size = 0x4, offset = 0x4, fixed_abs, tag = 'smem constant byte address 0x4 - core index']
  #allocation1 [shape = 'u32[144,128]{1,0:T(1,128)}', space=vmem, size = 0x12000, scoped, tag = 'internal scratch']
  %s0 = inlined_call_operand.hbm [shape: f32[1,2048], index: 0, kind: input, shape index: {}]
  %s1 = inlined_call_operand.hbm [shape: f32[1,2048], index: 1, kind: output, shape index: {}]
  %s2 = sld [smem:[#allocation0]]
  $region18: #{tpu_custom_call.1} parent=0
    _
  %s4 = ssub.s32 1, %s2
  %s5 = scalar_select 0, %s4, %s2
  $region1: #{tpu_custom_call.1} parent=0
    #allocation2 [shape = 'u8[8192]{0}', space=vmem, size = 0x2000, scoped, tag = 'input window, operand 0, single buffered']
    #allocation3 [shape = 's32[1]{0}', space=sflag, size = 0x4, scoped, tag = 'scoped memory for tpu_custom_call.1']
    #allocation4 [shape = 's32[1]{0}', space=sflag, size = 0x4, scoped, tag = 'scoped memory for tpu_custom_call.1']
    #allocation5 [shape = 'u8[8192]{0}', space=vmem, size = 0x2000, scoped, tag = 'output window, operand 0, single buffered']
    %6 = vsyncpa [#allocation3], 0
    %7 = vsyncpa [#allocation4], 0
    // Predicated region
    $region2: #{tpu_custom_call.1} parent=1 // pred_check
      _
    $region3: #{tpu_custom_call.1} parent=1 // pred_check_branch
      %9 = sbr.rel (0) target = $region5
    $region4: #{tpu_custom_call.1} parent=1 // pred_region
      %s11 = ssub.s32 256, 256
      %12 = vsyncadd [#allocation3], %s11
      %s14 = sshll.u32 [#allocation2], 4
      %s15 = int_to_ptr.vmem [resolvable:$true] %s14
      %17 = dma.hbm_to_vmem [thread:$0]  %s0, 256, %s15, [#allocation3]
    $region5: #{tpu_custom_call.1} parent=1 // pred_fallthru
      _
    // Predicated region
    $region6: #{tpu_custom_call.1} parent=1 // pred_check
      _
    $region7: #{tpu_custom_call.1} parent=1 // pred_check_branch
      %19 = sbr.rel (0) target = $region9
    $region8: #{tpu_custom_call.1} parent=1 // pred_region
      %20 = dma.done [#allocation3], 256
    $region9: #{tpu_custom_call.1} parent=1 // pred_fallthru
      _
    %v21 = vld [vmem:[#allocation2] sm:$0xff]
    %v22 = vld [vmem:[#allocation2 + $0x8] sm:$0xff]
    %v23 = vsub.f32 %v21, -2.0
    %v24 = vsub.f32 %v22, -2.0
    %v25 = vmul.f32 %v23, 0.5
    %v26 = vmul.f32 %v24, 0.5
    %v27 = vmax.f32 %v25, 0.0
    %v28 = vmax.f32 %v26, 0.0
    %v29 = vmin.f32 %v27, 2.0
    %v30 = vmin.f32 %v28, 2.0
    %31 = vst [vmem:[#allocation5] sm:$0xff] %v29
    %32 = vst [vmem:[#allocation5 + $0x8] sm:$0xff] %v30
    // Predicated region
    $region10: #{tpu_custom_call.1} parent=1 // pred_check
      _
    $region11: #{tpu_custom_call.1} parent=1 // pred_check_branch
      %34 = sbr.rel (0) target = $region13
    $region12: #{tpu_custom_call.1} parent=1 // pred_region
      %s36 = ssub.s32 256, 256
      %37 = vsyncadd [#allocation4], %s36
      %s39 = sshll.u32 [#allocation5], 4
      %s40 = int_to_ptr.vmem [resolvable:$true] %s39
      %42 = dma.vmem_to_hbm [thread:$0]  %s40, 256, %s1, [#allocation4]
    $region13: #{tpu_custom_call.1} parent=1 // pred_fallthru
      _
    // Predicated region
    $region14: #{tpu_custom_call.1} parent=1 // pred_check
      _
    $region15: #{tpu_custom_call.1} parent=1 // pred_check_branch
      %44 = sbr.rel (0) target = $region17
    $region16: #{tpu_custom_call.1} parent=1 // pred_region
      %45 = dma.done [#allocation4], 256
    $region17: #{tpu_custom_call.1} parent=1 // pred_fallthru
      _
    %46 = vsyncpa [#allocation3], 1
    %47 = vsyncpa [#allocation4], 1

</llo_original>
